<compile_context>
chip_gen: v7x
topology: tpu7x:2x2x1
jax: 0.10.0
libtpu: 0.0.40
codegen_flags: <defaults>
</compile_context>

<pallas_src>
import functools

import jax
import jax.numpy as jnp
from jax import lax
from jax.experimental import pallas as pl
from jax.experimental.pallas import tpu as pltpu


# ----------------------------------------------------------------------------
# Hardware / sizing helpers
# ----------------------------------------------------------------------------
def _vmem_capacity_bytes() -> int:
    try:
        info = pltpu.get_tpu_info()
        cap = getattr(info, "vmem_capacity_bytes", None)
        if cap:
            return int(cap)
    except Exception:
        pass
    return 64 * 1024 * 1024  # conservative: valid on v5e / v6e / v7x


def _round_up(v: int, m: int) -> int:
    return ((v + m - 1) // m) * m


def _pad2d(a, rows, cols):
    r, c = a.shape
    if r == rows and c == cols:
        return a
    return jnp.pad(a, ((0, rows - r), (0, cols - c)))


def _row_slab_need(tm, n, d, isz_c, isz_x, isz_o):
    # double-buffered C slab + (conservatively double-buffered) resident x
    # + double-buffered output slab + elementwise temps (diag mask path, f32 y).
    return (2 * tm * n * isz_c
            + 2 * n * d * isz_x
            + 2 * tm * d * isz_o
            + tm * n * 4
            + 2 * tm * d * 4)


def _pick_row_slab_tm(n, d, isz_c, isz_x, isz_o, budget):
    """Largest multiple-of-8 divisor of n fitting `budget` (prefer >=2 grid steps)."""
    def fits(tm):
        return _row_slab_need(tm, n, d, isz_c, isz_x, isz_o) <= budget

    best = None
    step_cap = min(n // 2, 4096)
    t = 8
    while t <= step_cap:
        if n % t == 0 and fits(t):
            best = t
        t += 8
    if best is not None:
        return best
    if fits(n):          # single-slab / full-dim-block path (handles odd n)
        return n
    return None


# ----------------------------------------------------------------------------
# Row-slab kernel: grid=(n//tm,), C slab (tm, n) streamed once, x resident.
# ----------------------------------------------------------------------------
def _row_slab_kernel(c_ref, x_ref, o_ref):
    i = pl.program_id(0)
    tm, n = c_ref.shape

    c_slab = c_ref[...]                                  # (tm, n)
    # Full-length reduction on the MXU (raw slab -> dot starts immediately).
    y = jnp.dot(c_slab, x_ref[...], preferred_element_type=jnp.float32)

    # Diagonal contribution, computed off the MXU critical path:
    #   diag[r] = C[i*tm + r, i*tm + r];   y[r, :] -= diag[r] * x[i*tm + r, :]
    row = lax.broadcasted_iota(jnp.int32, (tm, n), 0)
    col = lax.broadcasted_iota(jnp.int32, (tm, n), 1)
    diag_mask = col == (i * tm + row)
    # One-hot masked sum -> exact extraction of the diagonal values.
    diag = jnp.sum(jnp.where(diag_mask, c_slab, jnp.zeros_like(c_slab)),
                   axis=1, keepdims=True).astype(jnp.float32)    # (tm, 1)

    align = tm & (-tm)                                   # largest pow2 dividing tm
    start = pl.multiple_of(i * tm, min(align, 256))
    x_rows = x_ref[pl.ds(start, tm), :].astype(jnp.float32)       # (tm, d)

    o_ref[...] = (y - diag * x_rows).astype(o_ref.dtype)


def _row_slab_call(c, x, out_dtype, tm, vmem_cap):
    n, _ = c.shape
    _, d = x.shape
    isz_c = jnp.dtype(c.dtype).itemsize
    isz_x = jnp.dtype(x.dtype).itemsize
    isz_o = jnp.dtype(out_dtype).itemsize

    need = _row_slab_need(tm, n, d, isz_c, isz_x, isz_o)
    vmem_limit = int(min(max(need + (4 << 20), 32 << 20), vmem_cap - (8 << 20)))

    cost = pl.CostEstimate(
        flops=2 * n * n * d,
        transcendentals=0,
        bytes_accessed=n * n * isz_c + n * d * isz_x + n * d * isz_o)

    return pl.pallas_call(
        _row_slab_kernel,
        out_shape=jax.ShapeDtypeStruct((n, d), out_dtype),
        grid_spec=pltpu.PrefetchScalarGridSpec(
            num_scalar_prefetch=0,
            grid=(n // tm,),
            in_specs=[
                pl.BlockSpec((tm, n), lambda i: (i, 0)),   # C row slab (read once)
                pl.BlockSpec((n, d), lambda i: (0, 0)),    # x fully resident in VMEM
            ],
            out_specs=pl.BlockSpec((tm, d), lambda i: (i, 0)),
        ),
        compiler_params=pltpu.CompilerParams(
            dimension_semantics=("parallel",),
            vmem_limit_bytes=vmem_limit),
        cost_estimate=cost,
    )(c, x)


# ----------------------------------------------------------------------------
# k-tiled fallback: grid=(n//tm, d//tn, n//tk), global-index diagonal masking.
# Used only when x cannot stay resident in VMEM (huge n*d) or when forced.
# ----------------------------------------------------------------------------
def _k_tiled_masked_dot(c_ref, x_ref):
    i = pl.program_id(0)
    k = pl.program_id(2)
    tm, tk = c_ref.shape
    c_tile = c_ref[...]
    row_g = i * tm + lax.broadcasted_iota(jnp.int32, (tm, tk), 0)
    col_g = k * tk + lax.broadcasted_iota(jnp.int32, (tm, tk), 1)
    c_tile = jnp.where(row_g == col_g, jnp.zeros_like(c_tile), c_tile)
    return jnp.dot(c_tile, x_ref[...], preferred_element_type=jnp.float32)


def _k_tiled_kernel_out_acc(c_ref, x_ref, o_ref):
    @pl.when(pl.program_id(2) == 0)
    def _():
        o_ref[...] = jnp.zeros_like(o_ref)

    o_ref[...] += _k_tiled_masked_dot(c_ref, x_ref)


def _k_tiled_kernel_scratch(c_ref, x_ref, o_ref, acc_ref):
    @pl.when(pl.program_id(2) == 0)
    def _():
        acc_ref[...] = jnp.zeros_like(acc_ref)

    acc_ref[...] += _k_tiled_masked_dot(c_ref, x_ref)

    @pl.when(pl.program_id(2) == pl.num_programs(2) - 1)
    def _():
        o_ref[...] = acc_ref[...].astype(o_ref.dtype)


def _k_tiled_call(c, x, out_dtype, vmem_cap):
    n, _ = c.shape          # padded: multiple of 256
    _, d = x.shape          # padded: multiple of 128
    tm = 256
    tk = 512 if n % 512 == 0 else 256
    tn = 512 if d % 512 == 0 else (256 if d % 256 == 0 else 128)

    isz_c = jnp.dtype(c.dtype).itemsize
    isz_x = jnp.dtype(x.dtype).itemsize
    isz_o = jnp.dtype(out_dtype).itemsize

    acc_in_out = (jnp.dtype(out_dtype) == jnp.dtype(jnp.float32))
    kernel = _k_tiled_kernel_out_acc if acc_in_out else _k_tiled_kernel_scratch
    scratch = [] if acc_in_out else [pltpu.VMEM((tm, tn), jnp.float32)]

    need = (2 * (tm * tk * isz_c + tk * tn * isz_x)
            + 2 * tm * tn * isz_o
            + (0 if acc_in_out else tm * tn * 4)
            + tm * tk * 4)
    vmem_limit = int(min(max(need + (4 << 20), 32 << 20), vmem_cap - (8 << 20)))

    cost = pl.CostEstimate(
        flops=2 * n * n * d,
        transcendentals=0,
        # x really is re-read n/tm times with these specs; say so honestly.
        bytes_accessed=n * n * isz_c + (n // tm) * n * d * isz_x + n * d * isz_o)

    return pl.pallas_call(
        kernel,
        out_shape=jax.ShapeDtypeStruct((n, d), out_dtype),
        grid_spec=pltpu.PrefetchScalarGridSpec(
            num_scalar_prefetch=0,
            grid=(n // tm, d // tn, n // tk),
            in_specs=[
                pl.BlockSpec((tm, tk), lambda i, j, k: (i, k)),  # C tile
                pl.BlockSpec((tk, tn), lambda i, j, k: (k, j)),  # x tile
            ],
            out_specs=pl.BlockSpec((tm, tn), lambda i, j, k: (i, j)),
            scratch_shapes=scratch,
        ),
        compiler_params=pltpu.CompilerParams(
            dimension_semantics=("parallel", "parallel", "arbitrary"),
            vmem_limit_bytes=vmem_limit),
        cost_estimate=cost,
    )(c, x)


# ----------------------------------------------------------------------------
# Public wrapper:  y = (C - diag(diag(C))) @ x
# ----------------------------------------------------------------------------
@functools.partial(jax.jit, static_argnames=("use_bf16", "force_k_tiled"))
def self_expression(c: jax.Array, x: jax.Array, *,
                    use_bf16: bool = False, force_k_tiled: bool = False):
    n, n2 = c.shape
    assert n == n2, "c must be square"
    nx, d = x.shape
    assert nx == n, "x row count must match c"

    out_dtype = jnp.promote_types(c.dtype, x.dtype)

    # Opt-in reduced-precision compute (f32 accumulation is kept in-kernel).
    c_in = c.astype(jnp.bfloat16) if use_bf16 else c
    x_in = x.astype(jnp.bfloat16) if use_bf16 else x

    isz_c = jnp.dtype(c_in.dtype).itemsize
    isz_x = jnp.dtype(x_in.dtype).itemsize
    isz_o = jnp.dtype(out_dtype).itemsize

    vmem_cap = _vmem_capacity_bytes()
    budget = min(int(0.70 * vmem_cap), vmem_cap - (8 << 20))

    # --- main path: row-slab with resident x, on the original shapes ---------
    if not force_k_tiled:
        tm = _pick_row_slab_tm(n, d, isz_c, isz_x, isz_o, budget)
        if tm is not None:
            return _row_slab_call(c_in, x_in, out_dtype, tm, vmem_cap)

    # --- padded fallbacks (tile-friendly, lane-dense output) -----------------
    n_p = _round_up(n, 256)
    d_p = _round_up(d, 128)
    c_p = _pad2d(c_in, n_p, n_p)
    x_p = _pad2d(x_in, n_p, d_p)

    y_p = None
    if not force_k_tiled:
        tm = _pick_row_slab_tm(n_p, d_p, isz_c, isz_x, isz_o, budget)
        if tm is not None:
            y_p = _row_slab_call(c_p, x_p, out_dtype, tm, vmem_cap)
    if y_p is None:
        y_p = _k_tiled_call(c_p, x_p, out_dtype, vmem_cap)
    return y_p[:n, :d]


# ----------------------------------------------------------------------------
# Demo / self-check
# ----------------------------------------------------------------------------
if __name__ == "__main__":
    key = jax.random.PRNGKey(0)
    k1, k2, k3, k4, k5, k6 = jax.random.split(key, 6)

    def ref(cm, xm):
        return jnp.matmul(cm - jnp.diag(jnp.diag(cm)), xm,
                          precision=lax.Precision.HIGHEST)

    # 1) Main row-slab path with a multi-step grid (n=384 -> tm=192, 2 slabs).
    n, d = 384, 128
    c1 = 1e-10 * jnp.ones((n, n), jnp.float32) + 0.01 * jax.random.normal(
        k1, (n, n), dtype=jnp.float32)
    x1 = jax.random.normal(k2, (n, d), dtype=jnp.float32)
    y1 = jax.block_until_ready(self_expression(c1, x1))
    assert y1.shape == (n, d)
    assert jnp.allclose(y1, ref(c1, x1), atol=5e-4, rtol=5e-4), "row-slab mismatch"

    # 1b) Opt-in bf16 compute path (compared against bf16-rounded-input reference).
    c1b = c1.astype(jnp.bfloat16).astype(jnp.float32)
    x1b = x1.astype(jnp.bfloat16).astype(jnp.float32)
    y1b = jax.block_until_ready(self_expression(c1, x1, use_bf16=True))
    assert jnp.allclose(y1b, ref(c1b, x1b), atol=1e-3, rtol=1e-3), "bf16 mismatch"

    # 2) Odd shapes -> single-slab full-dim-block path (tm = n).
    n2_, d2_ = 100, 48
    c2 = 1e-10 * jnp.ones((n2_, n2_), jnp.float32) + 0.01 * jax.random.normal(
        k3, (n2_, n2_), dtype=jnp.float32)
    x2 = jax.random.normal(k4, (n2_, d2_), dtype=jnp.float32)
    y2 = jax.block_until_ready(self_expression(c2, x2))
    assert y2.shape == (n2_, d2_)
    assert jnp.allclose(y2, ref(c2, x2), atol=5e-4, rtol=5e-4), "single-slab mismatch"

    # 3) Exercise the padded k-tiled fallback at a small size (forced).
    n3_, d3_ = 640, 96
    c3 = 0.01 * jax.random.normal(k5, (n3_, n3_), dtype=jnp.float32)
    x3 = jax.random.normal(k6, (n3_, d3_), dtype=jnp.float32)
    y3 = jax.block_until_ready(self_expression(c3, x3, force_k_tiled=True))
    assert y3.shape == (n3_, d3_)
    assert jnp.allclose(y3, ref(c3, x3), atol=5e-4, rtol=5e-4), "k-tiled mismatch"

    print("KERNEL_OK")
</pallas_src>

<mosaic_0001>
module attributes {stable_mosaic.version = 11 : i64} {
  func.func @_row_slab_kernel(%arg0: i32, %arg1: memref<192x384xf32, #tpu.memory_space<vmem>>, %arg2: memref<384x128xf32, #tpu.memory_space<vmem>>, %arg3: memref<192x128xf32, #tpu.memory_space<vmem>>) attributes {dimension_semantics = [#tpu.dimension_semantics<parallel>], iteration_bounds = array<i64: 2>, scalar_prefetch = 0 : i64, scratch_operands = 0 : i64, tpu.core_type = #tpu.core_type<tc>, window_params = [{transform_indices = @transform_0, window_bounds = array<i64: 192, 384>}, {pipeline_mode = #tpu.pipeline_mode<synchronous>, transform_indices = @transform_1, window_bounds = array<i64: 384, 128>}, {transform_indices = @transform_2, window_bounds = array<i64: 192, 128>}]} {
    %c0 = arith.constant 0 : index
    %c0_0 = arith.constant 0 : index
    %0 = vector.load %arg1[%c0, %c0_0] : memref<192x384xf32, #tpu.memory_space<vmem>>, vector<192x384xf32>
    %c0_1 = arith.constant 0 : index
    %c0_2 = arith.constant 0 : index
    %1 = vector.load %arg2[%c0_1, %c0_2] : memref<384x128xf32, #tpu.memory_space<vmem>>, vector<384x128xf32>
    %cst = arith.constant dense<0.000000e+00> : vector<192x128xf32>
    %2 = tpu.matmul %0, %1, %cst {dimension_numbers = #tpu.dot_dimension_numbers<[1], [0], [0], [1], [0, 0, 1, 1], [], []>} : vector<192x384xf32>, vector<384x128xf32>, vector<192x128xf32> -> vector<192x128xf32>
    %3 = tpu.iota {dimensions = array<i32: 0>} : vector<192x384xi32>
    %4 = tpu.iota {dimensions = array<i32: 1>} : vector<192x384xi32>
    %c192_i32 = arith.constant 192 : i32
    %5 = arith.muli %arg0, %c192_i32 : i32
    %6 = vector.broadcast %5 : i32 to vector<192x384xi32>
    %7 = arith.addi %6, %3 : vector<192x384xi32>
    %8 = arith.cmpi eq, %4, %7 : vector<192x384xi32>
    %cst_3 = arith.constant 0.000000e+00 : f32
    %9 = vector.broadcast %cst_3 : f32 to vector<192x384xf32>
    %10 = arith.select %8, %0, %9 : vector<192x384xi1>, vector<192x384xf32>
    %cst_4 = arith.constant dense<0.000000e+00> : vector<192xf32>
    %11 = vector.multi_reduction <add>, %10, %cst_4 [1] : vector<192x384xf32> to vector<192xf32>
    %12 = vector.shape_cast %11 : vector<192xf32> to vector<192x1xf32>
    %c192_i32_5 = arith.constant 192 : i32
    %13 = arith.muli %arg0, %c192_i32_5 : i32
    %14 = tpu.assume_multiple %13, 64 : i32
    %15 = arith.index_cast %14 : i32 to index
    %c0_6 = arith.constant 0 : index
    %16 = vector.load %arg2[%15, %c0_6] : memref<384x128xf32, #tpu.memory_space<vmem>>, vector<192x128xf32>
    %17 = vector.broadcast %12 : vector<192x1xf32> to vector<192x128xf32>
    %18 = arith.mulf %17, %16 : vector<192x128xf32>
    %19 = arith.subf %2, %18 : vector<192x128xf32>
    %c0_7 = arith.constant 0 : index
    %c0_8 = arith.constant 0 : index
    %20 = vector.load %arg3[%c0_7, %c0_8] : memref<192x128xf32, #tpu.memory_space<vmem>>, vector<192x128xf32>
    tpu.vector_store %arg3[%c0_7, %c0_8], %19 {strides = array<i32>} : memref<192x128xf32, #tpu.memory_space<vmem>>, vector<192x128xf32>,
    return
  }
  func.func @transform_0(%arg0: i32) -> (i32, i32) {
    %c0_i32 = arith.constant 0 : i32
    %c0_i32_0 = arith.constant 0 : i32
    return %arg0, %c0_i32 : i32, i32
  }
  func.func @transform_1(%arg0: i32) -> (i32, i32) {
    %c0_i32 = arith.constant 0 : i32
    %c0_i32_0 = arith.constant 0 : i32
    %c0_i32_1 = arith.constant 0 : i32
    return %c0_i32, %c0_i32_0 : i32, i32
  }
  func.func @transform_2(%arg0: i32) -> (i32, i32) {
    %c0_i32 = arith.constant 0 : i32
    %c0_i32_0 = arith.constant 0 : i32
    return %arg0, %c0_i32 : i32, i32
  }
}

</mosaic_0001>

<llo_original>
// kernel: self_expression.1
$region0: #{self_expression.1}
  #allocation0 [shape = 'u32[]', space=smem, size = 0x4, offset = 0x4, fixed_abs, tag = 'smem constant byte address 0x4 - core index']
  #allocation1 [shape = 'u32[144,128]{1,0:T(1,128)}', space=vmem, size = 0x12000, scoped, tag = 'internal scratch']
  %s0 = inlined_call_operand.hbm [shape: f32[384,384], index: 0, kind: input, shape index: {}]
  %s1 = inlined_call_operand.hbm [shape: f32[384,128], index: 1, kind: input, shape index: {}]
  %s2 = inlined_call_operand.hbm [shape: f32[384,128], index: 2, kind: output, shape index: {}]
  %s3 = sld [smem:[#allocation0]]
  $region49: #{self_expression.1} parent=0
    _
  %s5 = ssub.s32 1, %s3
  %s6 = scalar_select 0, %s5, %s3
  $region1: #{self_expression.1} parent=0
    #allocation2 [shape = 'u8[589824]{0}', space=vmem, size = 0x90000, scoped, tag = 'input window, operand 0']
    #allocation3 [shape = 's32[2]{0}', space=sflag, size = 0x8, scoped, tag = 'scoped memory for self_expression.1']
    #allocation4 [shape = 's32[2]{0}', space=sflag, size = 0x8, scoped, tag = 'scoped memory for self_expression.1']
    #allocation5 [shape = 'u8[196608]{0}', space=vmem, size = 0x30000, scoped, tag = 'input window, operand 1, single buffered']
    #allocation6 [shape = 's32[1]{0}', space=sflag, size = 0x4, scoped, tag = 'scoped memory for self_expression.1']
    #allocation7 [shape = 'u8[196608]{0}', space=vmem, size = 0x30000, scoped, tag = 'output window, operand 0']
    %7 = vsyncpa [#allocation3], 0
    %s8 = scalar_lea.sflag [#allocation3], 1
    %9 = vsyncpa %s8, 0
    %10 = vsyncpa [#allocation6], 0
    %11 = vsyncpa [#allocation4], 0
    %s12 = scalar_lea.sflag [#allocation4], 1
    %13 = vsyncpa %s12, 0
    loop: start=0, step=1, limit=4
    $region2: #{self_expression.1} parent=1 // loop_pre_header
      _
    $region3: #{self_expression.1} parent=1 // loop_header
      %s15 = sphi 0, %s19
      %p16 = scmp.ge.s32.totalorder %s15, 4
      %s25 = sphi 0, %s27
      %s28 = sphi 0, %s25
      %s29 = sphi 0, %s28
      %s45 = sphi 0, %s29
      %s49 = sphi 0, %s49
      %s51 = sphi 0, %s49
      %s52 = sphi 0, %s51
      %s66 = sphi 0, %s52
      %s72 = sphi 0, %s74
      %s75 = sphi 0, %s72
      %s76 = sphi 0, %s75
      %s92 = sphi 0, %s76
    $region4: #{self_expression.1} parent=1 // loop_header_branch
      %18 = sbr.rel (%p16) target = $region8
    $region5: #{self_expression.1} parent=1 // loop_body
      %s20 = ssub.s32 %s15, 1
      %s21 = ssub.s32 %s15, 2
      %s22 = sadd.s32 %s15, 1
      %s23 = ssub.s32 %s15, %s22
      %p24 = scmp.eq.s32.totalorder %s23, 0
      %s26 = sadd.s32 %s25, 1
      %s27 = scalar_select %p24, %s25, %s26
      %p30 = pneg %p24
      %p31 = scmp.eq.s32.totalorder %s15, 1
      %p32 = por %p30, %p31
      %p33 = scmp.ne.s32.totalorder %s25, %s28
      %p34 = scmp.eq.s32.totalorder %s15, 0
      %p35 = por %p33, %p34
      %p36 = scmp.ne.s32.totalorder %s25, %s28
      %p37 = scmp.eq.s32.totalorder %s20, 1
      %p38 = por %p36, %p37
      %p39 = scmp.ne.s32.totalorder %s28, %s29
      %p40 = scmp.eq.s32.totalorder %s20, 0
      %p41 = por %p39, %p40
      %p42 = scmp.ne.s32.totalorder %s28, %s29
      %p43 = scmp.eq.s32.totalorder %s21, 1
      %p44 = por %p42, %p43
      %p46 = scmp.ne.s32.totalorder %s29, %s45
      %p47 = scmp.eq.s32.totalorder %s21, 0
      %p48 = por %p46, %p47
      %s50 = sadd.s32 %s49, 1
      %p53 = scmp.eq.s32.totalorder %s15, 1
      %p54 = scmp.ne.s32.totalorder %s49, %s51
      %p55 = scmp.eq.s32.totalorder %s15, 0
      %p56 = por %p54, %p55
      %p57 = scmp.ne.s32.totalorder %s49, %s51
      %p58 = scmp.eq.s32.totalorder %s20, 1
      %p59 = por %p57, %p58
      %p60 = scmp.ne.s32.totalorder %s51, %s52
      %p61 = scmp.eq.s32.totalorder %s20, 0
      %p62 = por %p60, %p61
      %p63 = scmp.ne.s32.totalorder %s51, %s52
      %p64 = scmp.eq.s32.totalorder %s21, 1
      %p65 = por %p63, %p64
      %p67 = scmp.ne.s32.totalorder %s52, %s66
      %p68 = scmp.eq.s32.totalorder %s21, 0
      %p69 = por %p67, %p68
      %s70 = ssub.s32 %s15, %s22
      %p71 = scmp.eq.s32.totalorder %s70, 0
      %s73 = sadd.s32 %s72, 1
      %s74 = scalar_select %p71, %s72, %s73
      %p77 = pneg %p71
      %p78 = scmp.eq.s32.totalorder %s15, 1
      %p79 = por %p77, %p78
      %p80 = scmp.ne.s32.totalorder %s72, %s75
      %p81 = scmp.eq.s32.totalorder %s15, 0
      %p82 = por %p80, %p81
      %p83 = scmp.ne.s32.totalorder %s72, %s75
      %p84 = scmp.eq.s32.totalorder %s20, 1
      %p85 = por %p83, %p84
      %p86 = scmp.ne.s32.totalorder %s75, %s76
      %p87 = scmp.eq.s32.totalorder %s20, 0
      %p88 = por %p86, %p87
      %p89 = scmp.ne.s32.totalorder %s75, %s76
      %p90 = scmp.eq.s32.totalorder %s21, 1
      %p91 = por %p89, %p90
      %p93 = scmp.ne.s32.totalorder %s76, %s92
      %p94 = scmp.eq.s32.totalorder %s21, 0
      %p95 = por %p93, %p94
      %p96 = scmp.le.s32.totalorder 1, %s15
      %p97 = scmp.lt.s32.totalorder %s15, 3
      %p98 = pnand %p96, %p97
      %p99 = pneg %p98
      // Predicated region
      $region9: #{self_expression.1} parent=5 // pred_check
        _
      $region10: #{self_expression.1} parent=5 // pred_check_branch
        %101 = sbr.rel (%p98) target = $region12
      $region11: #{self_expression.1} parent=5 // pred_region
        %s102 = ssub.s32 %s15, 1
        // Predicated region
        $region13: #{self_expression.1} parent=11 // pred_check
          %p103 = pneg %p62
        $region14: #{self_expression.1} parent=11 // pred_check_branch
          %105 = sbr.rel (%p103) target = $region16
        $region15: #{self_expression.1} parent=11 // pred_region
          %s107 = ssub.s32 6144, 6144
          %108 = vsyncadd [#allocation6], %s107
          %s109 = sshll.u32 [#allocation5], 4
          %s110 = int_to_ptr.vmem [resolvable:$true] %s109
          %115 = dma.hbm_to_vmem [thread:$0]  %s1, 6144, %s110, [#allocation6], 128, 128, 8
        $region16: #{self_expression.1} parent=11 // pred_fallthru
          _
      $region12: #{self_expression.1} parent=5 // pred_fallthru
        _
      %p116 = scmp.lt.s32.totalorder %s15, 2
      // Predicated region
      $region17: #{self_expression.1} parent=5 // pred_check
        %p117 = pneg %p116
      $region18: #{self_expression.1} parent=5 // pred_check_branch
        %119 = sbr.rel (%p117) target = $region20
      $region19: #{self_expression.1} parent=5 // pred_region
        // Predicated region
        $region21: #{self_expression.1} parent=19 // pred_check
          %p120 = pneg %p35
        $region22: #{self_expression.1} parent=19 // pred_check_branch
          %122 = sbr.rel (%p120) target = $region24
        $region23: #{self_expression.1} parent=19 // pred_region
          %s123 = sand.u32 %s25, 1
          %s124 = scalar_lea.sflag [#allocation3], %s123
          %s125 = sand.u32 %s25, 1
          %s126 = smul.addr %s125, 576
          %s127 = scalar_lea.vmem [#allocation2], %s126
          %s128 = smul.u32 24, %s15
          %s130 = ssub.s32 9216, 9216
          %131 = vsyncadd %s124, %s130
          %s132 = smul.addr %s128, 3
          %s133 = smul.addr %s132, 128
          %s134 = scalar_lea.hbm %s0, %s133
          %s135 = sshll.u32 %s127, 4
          %s136 = int_to_ptr.vmem [resolvable:$true] %s135
          %141 = dma.hbm_to_vmem [thread:$0]  %s134, 9216, %s136, %s124, 384, 384, 24
        $region24: #{self_expression.1} parent=19 // pred_fallthru
          _
      $region20: #{self_expression.1} parent=5 // pred_fallthru
        _
      %p142 = scmp.le.s32.totalorder 1, %s15
      %p143 = scmp.lt.s32.totalorder %s15, 3
      %p144 = pnand %p142, %p143
      %p145 = pneg %p144
      // Predicated region
      $region25: #{self_expression.1} parent=5 // pred_check
        _
      $region26: #{self_expression.1} parent=5 // pred_check_branch
        %147 = sbr.rel (%p144) target = $region28
      $region27: #{self_expression.1} parent=5 // pred_region
        %s148 = ssub.s32 %s15, 1
        %s149 = sand.u32 %s28, 1
        %s150 = scalar_lea.sflag [#allocation3], %s149
        %s151 = sand.u32 %s28, 1
        %s152 = smul.addr %s151, 576
        %s153 = scalar_lea.vmem [#allocation2], %s152
        // Predicated region
        $region29: #{self_expression.1} parent=27 // pred_check
          %p154 = pneg %p41
        $region30: #{self_expression.1} parent=27 // pred_check_branch
          %156 = sbr.rel (%p154) target = $region32
        $region31: #{self_expression.1} parent=27 // pred_region
          %157 = dma.done %s150, 9216
        $region32: #{self_expression.1} parent=27 // pred_fallthru
          _
        // Predicated region
        $region33: #{self_expression.1} parent=27 // pred_check
          %p158 = pneg %p62
        $region34: #{self_expression.1} parent=27 // pred_check_branch
          %160 = sbr.rel (%p158) target = $region36
        $region35: #{self_expression.1} parent=27 // pred_region
          %161 = dma.done [#allocation6], 6144
        $region36: #{self_expression.1} parent=27 // pred_fallthru
          _
        %s162 = sand.u32 %s28, 1
        %s163 = scalar_lea.sflag [#allocation3], %s162
        %s164 = sand.u32 %s28, 1
        %s165 = smul.addr %s164, 576
        %s166 = scalar_lea.vmem [#allocation2], %s165
        %p167 = pneg %p41
        %p168 = pneg %p38
        %p169 = pneg %p62
        %p170 = pneg %p59
        %p171 = pneg %p88
        %p172 = pneg %p85
        %s173 = sand.u32 %s75, 1
        %s174 = scalar_lea.sflag [#allocation4], %s173
        %s175 = sand.u32 %s75, 1
        %s176 = smul.addr %s175, 192
        %s177 = scalar_lea.vmem [#allocation7], %s176
        %s178 = smul.u32 24, %s20
        %s179 = smul.u32 24, %s20
        %v180 = vld [vmem:[%s153] sm:$0xff]
        %v181 = vld [vmem:[%s153 + $0x8] sm:$0xff]
        %v182 = vld [vmem:[%s153 + $0x10] sm:$0xff]
        %v183 = vld [vmem:[%s153 + $0x18] sm:$0xff]
        %v184 = vld [vmem:[%s153 + $0x20] sm:$0xff]
        %v185 = vld [vmem:[%s153 + $0x28] sm:$0xff]
        %v186 = vld [vmem:[%s153 + $0x30] sm:$0xff]
        %v187 = vld [vmem:[%s153 + $0x38] sm:$0xff]
        %v188 = vld [vmem:[%s153 + $0x40] sm:$0xff]
        %v189 = vld [vmem:[%s153 + $0x48] sm:$0xff]
        %v190 = vld [vmem:[%s153 + $0x50] sm:$0xff]
        %v191 = vld [vmem:[%s153 + $0x58] sm:$0xff]
        %v192 = vld [vmem:[%s153 + $0x60] sm:$0xff]
        %v193 = vld [vmem:[%s153 + $0x68] sm:$0xff]
        %v194 = vld [vmem:[%s153 + $0x70] sm:$0xff]
        %v195 = vld [vmem:[%s153 + $0x78] sm:$0xff]
        %v196 = vld [vmem:[%s153 + $0x80] sm:$0xff]
        %v197 = vld [vmem:[%s153 + $0x88] sm:$0xff]
        %v198 = vld [vmem:[%s153 + $0x90] sm:$0xff]
        %v199 = vld [vmem:[%s153 + $0x98] sm:$0xff]
        %v200 = vld [vmem:[%s153 + $0xa0] sm:$0xff]
        %v201 = vld [vmem:[%s153 + $0xa8] sm:$0xff]
        %v202 = vld [vmem:[%s153 + $0xb0] sm:$0xff]
        %v203 = vld [vmem:[%s153 + $0xb8] sm:$0xff]
        %v204 = vld [vmem:[%s153 + $0xc0] sm:$0xff]
        %v205 = vld [vmem:[%s153 + $0xc8] sm:$0xff]
        %v206 = vld [vmem:[%s153 + $0xd0] sm:$0xff]
        %v207 = vld [vmem:[%s153 + $0xd8] sm:$0xff]
        %v208 = vld [vmem:[%s153 + $0xe0] sm:$0xff]
        %v209 = vld [vmem:[%s153 + $0xe8] sm:$0xff]
        %v210 = vld [vmem:[%s153 + $0xf0] sm:$0xff]
        %v211 = vld [vmem:[%s153 + $0xf8] sm:$0xff]
        %v212 = vld [vmem:[%s153 + $0x100] sm:$0xff]
        %v213 = vld [vmem:[%s153 + $0x108] sm:$0xff]
        %v214 = vld [vmem:[%s153 + $0x110] sm:$0xff]
        %v215 = vld [vmem:[%s153 + $0x118] sm:$0xff]
        %v216 = vld [vmem:[%s153 + $0x120] sm:$0xff]
        %v217 = vld [vmem:[%s153 + $0x128] sm:$0xff]
        %v218 = vld [vmem:[%s153 + $0x130] sm:$0xff]
        %v219 = vld [vmem:[%s153 + $0x138] sm:$0xff]
        %v220 = vld [vmem:[%s153 + $0x140] sm:$0xff]
        %v221 = vld [vmem:[%s153 + $0x148] sm:$0xff]
        %v222 = vld [vmem:[%s153 + $0x150] sm:$0xff]
        %v223 = vld [vmem:[%s153 + $0x158] sm:$0xff]
        %v224 = vld [vmem:[%s153 + $0x160] sm:$0xff]
        %v225 = vld [vmem:[%s153 + $0x168] sm:$0xff]
        %v226 = vld [vmem:[%s153 + $0x170] sm:$0xff]
        %v227 = vld [vmem:[%s153 + $0x178] sm:$0xff]
        %v228 = vld [vmem:[%s153 + $0x180] sm:$0xff]
        %v229 = vld [vmem:[%s153 + $0x188] sm:$0xff]
        %v230 = vld [vmem:[%s153 + $0x190] sm:$0xff]
        %v231 = vld [vmem:[%s153 + $0x198] sm:$0xff]
        %v232 = vld [vmem:[%s153 + $0x1a0] sm:$0xff]
        %v233 = vld [vmem:[%s153 + $0x1a8] sm:$0xff]
        %v234 = vld [vmem:[%s153 + $0x1b0] sm:$0xff]
        %v235 = vld [vmem:[%s153 + $0x1b8] sm:$0xff]
        %v236 = vld [vmem:[%s153 + $0x1c0] sm:$0xff]
        %v237 = vld [vmem:[%s153 + $0x1c8] sm:$0xff]
        %v238 = vld [vmem:[%s153 + $0x1d0] sm:$0xff]
        %v239 = vld [vmem:[%s153 + $0x1d8] sm:$0xff]
        %v240 = vld [vmem:[%s153 + $0x1e0] sm:$0xff]
        %v241 = vld [vmem:[%s153 + $0x1e8] sm:$0xff]
        %v242 = vld [vmem:[%s153 + $0x1f0] sm:$0xff]
        %v243 = vld [vmem:[%s153 + $0x1f8] sm:$0xff]
        %v244 = vld [vmem:[%s153 + $0x200] sm:$0xff]
        %v245 = vld [vmem:[%s153 + $0x208] sm:$0xff]
        %v246 = vld [vmem:[%s153 + $0x210] sm:$0xff]
        %v247 = vld [vmem:[%s153 + $0x218] sm:$0xff]
        %v248 = vld [vmem:[%s153 + $0x220] sm:$0xff]
        %v249 = vld [vmem:[%s153 + $0x228] sm:$0xff]
        %v250 = vld [vmem:[%s153 + $0x230] sm:$0xff]
        %v251 = vld [vmem:[%s153 + $0x238] sm:$0xff]
        %v252 = vld [vmem:[#allocation5] sm:$0xff]
        %v253 = vld [vmem:[#allocation5 + $0x8] sm:$0xff]
        %v254 = vld [vmem:[#allocation5 + $0x10] sm:$0xff]
        %v255 = vld [vmem:[#allocation5 + $0x18] sm:$0xff]
        %v256 = vld [vmem:[#allocation5 + $0x20] sm:$0xff]
        %v257 = vld [vmem:[#allocation5 + $0x28] sm:$0xff]
        %v258 = vld [vmem:[#allocation5 + $0x30] sm:$0xff]
        %v259 = vld [vmem:[#allocation5 + $0x38] sm:$0xff]
        %v260 = vld [vmem:[#allocation5 + $0x40] sm:$0xff]
        %v261 = vld [vmem:[#allocation5 + $0x48] sm:$0xff]
        %v262 = vld [vmem:[#allocation5 + $0x50] sm:$0xff]
        %v263 = vld [vmem:[#allocation5 + $0x58] sm:$0xff]
        %v264 = vld [vmem:[#allocation5 + $0x60] sm:$0xff]
        %v265 = vld [vmem:[#allocation5 + $0x68] sm:$0xff]
        %v266 = vld [vmem:[#allocation5 + $0x70] sm:$0xff]
        %v267 = vld [vmem:[#allocation5 + $0x78] sm:$0xff]
        %v268 = vld [vmem:[#allocation5 + $0x80] sm:$0xff]
        %v269 = vld [vmem:[#allocation5 + $0x88] sm:$0xff]
        %v270 = vld [vmem:[#allocation5 + $0x90] sm:$0xff]
        %v271 = vld [vmem:[#allocation5 + $0x98] sm:$0xff]
        %v272 = vld [vmem:[#allocation5 + $0xa0] sm:$0xff]
        %v273 = vld [vmem:[#allocation5 + $0xa8] sm:$0xff]
        %v274 = vld [vmem:[#allocation5 + $0xb0] sm:$0xff]
        %v275 = vld [vmem:[#allocation5 + $0xb8] sm:$0xff]
        %v276 = vld [vmem:[#allocation5 + $0xc0] sm:$0xff]
        %v277 = vld [vmem:[#allocation5 + $0xc8] sm:$0xff]
        %v278 = vld [vmem:[#allocation5 + $0xd0] sm:$0xff]
        %v279 = vld [vmem:[#allocation5 + $0xd8] sm:$0xff]
        %v280 = vld [vmem:[#allocation5 + $0xe0] sm:$0xff]
        %v281 = vld [vmem:[#allocation5 + $0xe8] sm:$0xff]
        %v282 = vld [vmem:[#allocation5 + $0xf0] sm:$0xff]
        %v283 = vld [vmem:[#allocation5 + $0xf8] sm:$0xff]
        %v284 = vld [vmem:[#allocation5 + $0x100] sm:$0xff]
        %v285 = vld [vmem:[#allocation5 + $0x108] sm:$0xff]
        %v286 = vld [vmem:[#allocation5 + $0x110] sm:$0xff]
        %v287 = vld [vmem:[#allocation5 + $0x118] sm:$0xff]
        %v288 = vld [vmem:[#allocation5 + $0x120] sm:$0xff]
        %v289 = vld [vmem:[#allocation5 + $0x128] sm:$0xff]
        %v290 = vld [vmem:[#allocation5 + $0x130] sm:$0xff]
        %v291 = vld [vmem:[#allocation5 + $0x138] sm:$0xff]
        %v292 = vld [vmem:[#allocation5 + $0x140] sm:$0xff]
        %v293 = vld [vmem:[#allocation5 + $0x148] sm:$0xff]
        %v294 = vld [vmem:[#allocation5 + $0x150] sm:$0xff]
        %v295 = vld [vmem:[#allocation5 + $0x158] sm:$0xff]
        %v296 = vld [vmem:[#allocation5 + $0x160] sm:$0xff]
        %v297 = vld [vmem:[#allocation5 + $0x168] sm:$0xff]
        %v298 = vld [vmem:[#allocation5 + $0x170] sm:$0xff]
        %v299 = vld [vmem:[#allocation5 + $0x178] sm:$0xff]
        %300 = vmatprep.subr.mxu0 0.0
        %301 = vmatpush1.msra.mxu0 %v252
        %302 = vmatprep.subr.mxu0 0.0
        %303 = vmatpush1.msra.mxu0 %v253
        %304 = vmatprep.subr.mxu0 0.0
        %305 = vmatpush1.msra.mxu0 %v254
        %306 = vmatprep.subr.mxu0 0.0
        %307 = vmatpush1.msra.mxu0 %v255
        %308 = vmatprep.subr.mxu0 0.0
        %309 = vmatpush1.msra.mxu0 %v256
        %310 = vmatprep.subr.mxu0 0.0
        %311 = vmatpush1.msra.mxu0 %v257
        %312 = vmatprep.subr.mxu0 0.0
        %313 = vmatpush1.msra.mxu0 %v258
        %314 = vmatprep.subr.mxu0 0.0
        %315 = vmatpush1.msra.mxu0 %v259
        %316 = vmatprep.subr.mxu0 0.0
        %317 = vmatpush1.msra.mxu0 %v260
        %318 = vmatprep.subr.mxu0 0.0
        %319 = vmatpush1.msra.mxu0 %v261
        %320 = vmatprep.subr.mxu0 0.0
        %321 = vmatpush1.msra.mxu0 %v262
        %322 = vmatprep.subr.mxu0 0.0
        %323 = vmatpush1.msra.mxu0 %v263
        %324 = vmatprep.subr.mxu0 0.0
        %325 = vmatpush1.msra.mxu0 %v264
        %326 = vmatprep.subr.mxu0 0.0
        %327 = vmatpush1.msra.mxu0 %v265
        %328 = vmatprep.subr.mxu0 0.0
        %329 = vmatpush1.msra.mxu0 %v266
        %330 = vmatprep.subr.mxu0 0.0
        %331 = vmatpush1.msra.mxu0 %v267
        %332 = vmatprep.subr.mxu0 0.0
        %333 = vmatpush1.msra.mxu0 %v268
        %334 = vmatprep.subr.mxu0 0.0
        %335 = vmatpush1.msra.mxu0 %v269
        %336 = vmatprep.subr.mxu0 0.0
        %337 = vmatpush1.msra.mxu0 %v270
        %338 = vmatprep.subr.mxu0 0.0
        %339 = vmatpush1.msra.mxu0 %v271
        %340 = vmatprep.subr.mxu0 0.0
        %341 = vmatpush1.msra.mxu0 %v272
        %342 = vmatprep.subr.mxu0 0.0
        %343 = vmatpush1.msra.mxu0 %v273
        %344 = vmatprep.subr.mxu0 0.0
        %345 = vmatpush1.msra.mxu0 %v274
        %346 = vmatprep.subr.mxu0 0.0
        %347 = vmatpush1.msra.mxu0 %v275
        %348 = vmatprep.subr.mxu0 0.0
        %349 = vmatpush1.msra.mxu0 %v276
        %350 = vmatprep.subr.mxu0 0.0
        %351 = vmatpush1.msra.mxu0 %v277
        %352 = vmatprep.subr.mxu0 0.0
        %353 = vmatpush1.msra.mxu0 %v278
        %354 = vmatprep.subr.mxu0 0.0
        %355 = vmatpush1.msra.mxu0 %v279
        %356 = vmatprep.subr.mxu0 0.0
        %357 = vmatpush1.msra.mxu0 %v280
        %358 = vmatprep.subr.mxu0 0.0
        %359 = vmatpush1.msra.mxu0 %v281
        %360 = vmatprep.subr.mxu0 0.0
        %361 = vmatpush1.msra.mxu0 %v282
        %362 = vmatprep.subr.mxu0 0.0
        %363 = vmatpush1.msra.mxu0 %v283
        %364 = vmatprep.mubr.f32.mxu0 %v181
        %365 = vmatmul.mubr.f32.gmra.mrb[0].mxu0 %v180
        %v366 = vpop.f32.mrb[0].mxu0
        %v367 = vadd.f32 0.0, %v366
        %v368 = vpop.f32.mrb[0].mxu0
        %369 = vmatprep.mubr.f32.mxu0 %v184
        %370 = vmatmul.mubr.f32.gmra.mrb[0].mxu0 %v183
        %v371 = vpop.f32.mrb[0].mxu0
        %v372 = vadd.f32 0.0, %v371
        %v373 = vpop.f32.mrb[0].mxu0
        %374 = vmatprep.mubr.f32.mxu0 %v187
        %375 = vmatmul.mubr.f32.gmra.mrb[0].mxu0 %v186
        %v376 = vpop.f32.mrb[0].mxu0
        %v377 = vadd.f32 0.0, %v376
        %v378 = vpop.f32.mrb[0].mxu0
        %379 = vmatprep.mubr.f32.mxu0 %v190
        %380 = vmatmul.mubr.f32.gmra.mrb[0].mxu0 %v189
        %v381 = vpop.f32.mrb[0].mxu0
        %v382 = vadd.f32 0.0, %v381
        %v383 = vpop.f32.mrb[0].mxu0
        %384 = vmatprep.mubr.f32.mxu0 %v193
        %385 = vmatmul.mubr.f32.gmra.mrb[0].mxu0 %v192
        %v386 = vpop.f32.mrb[0].mxu0
        %v387 = vadd.f32 0.0, %v386
        %v388 = vpop.f32.mrb[0].mxu0
        %389 = vmatprep.mubr.f32.mxu0 %v196
        %390 = vmatmul.mubr.f32.gmra.mrb[0].mxu0 %v195
        %v391 = vpop.f32.mrb[0].mxu0
        %v392 = vadd.f32 0.0, %v391
        %v393 = vpop.f32.mrb[0].mxu0
        %394 = vmatprep.mubr.f32.mxu0 %v199
        %395 = vmatmul.mubr.f32.gmra.mrb[0].mxu0 %v198
        %v396 = vpop.f32.mrb[0].mxu0
        %v397 = vadd.f32 0.0, %v396
        %v398 = vpop.f32.mrb[0].mxu0
        %399 = vmatprep.mubr.f32.mxu0 %v202
        %400 = vmatmul.mubr.f32.gmra.mrb[0].mxu0 %v201
        %v401 = vpop.f32.mrb[0].mxu0
        %v402 = vadd.f32 0.0, %v401
        %v403 = vpop.f32.mrb[0].mxu0
        %404 = vmatprep.mubr.f32.mxu0 %v205
        %405 = vmatmul.mubr.f32.gmra.mrb[0].mxu0 %v204
        %v406 = vpop.f32.mrb[0].mxu0
        %v407 = vadd.f32 0.0, %v406
        %v408 = vpop.f32.mrb[0].mxu0
        %409 = vmatprep.mubr.f32.mxu0 %v208
        %410 = vmatmul.mubr.f32.gmra.mrb[0].mxu0 %v207
        %v411 = vpop.f32.mrb[0].mxu0
        %v412 = vadd.f32 0.0, %v411
        %v413 = vpop.f32.mrb[0].mxu0
        %414 = vmatprep.mubr.f32.mxu0 %v211
        %415 = vmatmul.mubr.f32.gmra.mrb[0].mxu0 %v210
        %v416 = vpop.f32.mrb[0].mxu0
        %v417 = vadd.f32 0.0, %v416
        %v418 = vpop.f32.mrb[0].mxu0
        %419 = vmatprep.mubr.f32.mxu0 %v214
        %420 = vmatmul.mubr.f32.gmra.mrb[0].mxu0 %v213
        %v421 = vpop.f32.mrb[0].mxu0
        %v422 = vadd.f32 0.0, %v421
        %v423 = vpop.f32.mrb[0].mxu0
        %424 = vmatprep.mubr.f32.mxu0 %v217
        %425 = vmatmul.mubr.f32.gmra.mrb[0].mxu0 %v216
        %v426 = vpop.f32.mrb[0].mxu0
        %v427 = vadd.f32 0.0, %v426
        %v428 = vpop.f32.mrb[0].mxu0
        %429 = vmatprep.mubr.f32.mxu0 %v220
        %430 = vmatmul.mubr.f32.gmra.mrb[0].mxu0 %v219
        %v431 = vpop.f32.mrb[0].mxu0
        %v432 = vadd.f32 0.0, %v431
        %v433 = vpop.f32.mrb[0].mxu0
        %434 = vmatprep.mubr.f32.mxu0 %v223
        %435 = vmatmul.mubr.f32.gmra.mrb[0].mxu0 %v222
        %v436 = vpop.f32.mrb[0].mxu0
        %v437 = vadd.f32 0.0, %v436
        %v438 = vpop.f32.mrb[0].mxu0
        %439 = vmatprep.mubr.f32.mxu0 %v226
        %440 = vmatmul.mubr.f32.gmra.mrb[0].mxu0 %v225
        %v441 = vpop.f32.mrb[0].mxu0
        %v442 = vadd.f32 0.0, %v441
        %v443 = vpop.f32.mrb[0].mxu0
        %444 = vmatprep.mubr.f32.mxu0 %v229
        %445 = vmatmul.mubr.f32.gmra.mrb[0].mxu0 %v228
        %v446 = vpop.f32.mrb[0].mxu0
        %v447 = vadd.f32 0.0, %v446
        %v448 = vpop.f32.mrb[0].mxu0
        %449 = vmatprep.mubr.f32.mxu0 %v232
        %450 = vmatmul.mubr.f32.gmra.mrb[0].mxu0 %v231
        %v451 = vpop.f32.mrb[0].mxu0
        %v452 = vadd.f32 0.0, %v451
        %v453 = vpop.f32.mrb[0].mxu0
        %454 = vmatprep.mubr.f32.mxu0 %v235
        %455 = vmatmul.mubr.f32.gmra.mrb[0].mxu0 %v234
        %v456 = vpop.f32.mrb[0].mxu0
        %v457 = vadd.f32 0.0, %v456
        %v458 = vpop.f32.mrb[0].mxu0
        %459 = vmatprep.mubr.f32.mxu0 %v238
        %460 = vmatmul.mubr.f32.gmra.mrb[0].mxu0 %v237
        %v461 = vpop.f32.mrb[0].mxu0
        %v462 = vadd.f32 0.0, %v461
        %v463 = vpop.f32.mrb[0].mxu0
        %464 = vmatprep.mubr.f32.mxu0 %v241
        %465 = vmatmul.mubr.f32.gmra.mrb[0].mxu0 %v240
        %v466 = vpop.f32.mrb[0].mxu0
        %v467 = vadd.f32 0.0, %v466
        %v468 = vpop.f32.mrb[0].mxu0
        %469 = vmatprep.mubr.f32.mxu0 %v244
        %470 = vmatmul.mubr.f32.gmra.mrb[0].mxu0 %v243
        %v471 = vpop.f32.mrb[0].mxu0
        %v472 = vadd.f32 0.0, %v471
        %v473 = vpop.f32.mrb[0].mxu0
        %474 = vmatprep.mubr.f32.mxu0 %v247
        %475 = vmatmul.mubr.f32.gmra.mrb[0].mxu0 %v246
        %v476 = vpop.f32.mrb[0].mxu0
        %v477 = vadd.f32 0.0, %v476
        %v478 = vpop.f32.mrb[0].mxu0
        %479 = vmatprep.mubr.f32.mxu0 %v250
        %480 = vmatmul.mubr.f32.gmra.mrb[0].mxu0 %v249
        %v481 = vpop.f32.mrb[0].mxu0
        %v482 = vadd.f32 0.0, %v481
        %v483 = vpop.f32.mrb[0].mxu0
        %484 = vdwg.mxu0
        %485 = vmatprep.subr.mxu0 0.0
        %486 = vmatpush1.msra.mxu0 %v284
        %487 = vmatprep.subr.mxu0 0.0
        %488 = vmatpush1.msra.mxu0 %v285
        %489 = vmatprep.subr.mxu0 0.0
        %490 = vmatpush1.msra.mxu0 %v286
        %491 = vmatprep.subr.mxu0 0.0
        %492 = vmatpush1.msra.mxu0 %v287
        %493 = vmatprep.subr.mxu0 0.0
        %494 = vmatpush1.msra.mxu0 %v288
        %495 = vmatprep.subr.mxu0 0.0
        %496 = vmatpush1.msra.mxu0 %v289
        %497 = vmatprep.subr.mxu0 0.0
        %498 = vmatpush1.msra.mxu0 %v290
        %499 = vmatprep.subr.mxu0 0.0
        %500 = vmatpush1.msra.mxu0 %v291
        %501 = vmatprep.subr.mxu0 0.0
        %502 = vmatpush1.msra.mxu0 %v292
        %503 = vmatprep.subr.mxu0 0.0
        %504 = vmatpush1.msra.mxu0 %v293
        %505 = vmatprep.subr.mxu0 0.0
        %506 = vmatpush1.msra.mxu0 %v294
        %507 = vmatprep.subr.mxu0 0.0
        %508 = vmatpush1.msra.mxu0 %v295
        %509 = vmatprep.subr.mxu0 0.0
        %510 = vmatpush1.msra.mxu0 %v296
        %511 = vmatprep.subr.mxu0 0.0
        %512 = vmatpush1.msra.mxu0 %v297
        %513 = vmatprep.subr.mxu0 0.0
        %514 = vmatpush1.msra.mxu0 %v298
        %515 = vmatprep.subr.mxu0 0.0
        %516 = vmatpush1.msra.mxu0 %v299
        %517 = vmatprep.subr.mxu0 0.0
        %518 = vmatpush1.msra.mxu0 0.0
        %519 = vmatprep.subr.mxu0 0.0
        %520 = vmatpush1.msra.mxu0 0.0
        %521 = vmatprep.subr.mxu0 0.0
        %522 = vmatpush1.msra.mxu0 0.0
        %523 = vmatprep.subr.mxu0 0.0
        %524 = vmatpush1.msra.mxu0 0.0
        %525 = vmatprep.subr.mxu0 0.0
        %526 = vmatpush1.msra.mxu0 0.0
        %527 = vmatprep.subr.mxu0 0.0
        %528 = vmatpush1.msra.mxu0 0.0
        %529 = vmatprep.subr.mxu0 0.0
        %530 = vmatpush1.msra.mxu0 0.0
        %531 = vmatprep.subr.mxu0 0.0
        %532 = vmatpush1.msra.mxu0 0.0
        %533 = vmatprep.subr.mxu0 0.0
        %534 = vmatpush1.msra.mxu0 0.0
        %535 = vmatprep.subr.mxu0 0.0
        %536 = vmatpush1.msra.mxu0 0.0
        %537 = vmatprep.subr.mxu0 0.0
        %538 = vmatpush1.msra.mxu0 0.0
        %539 = vmatprep.subr.mxu0 0.0
        %540 = vmatpush1.msra.mxu0 0.0
        %541 = vmatprep.subr.mxu0 0.0
        %542 = vmatpush1.msra.mxu0 0.0
        %543 = vmatprep.subr.mxu0 0.0
        %544 = vmatpush1.msra.mxu0 0.0
        %545 = vmatprep.subr.mxu0 0.0
        %546 = vmatpush1.msra.mxu0 0.0
        %547 = vmatprep.subr.mxu0 0.0
        %548 = vmatpush1.msra.mxu0 0.0
        %549 = vmatprep.mubr.f32.mxu0 0.0
        %550 = vmatmul.mubr.f32.gmra.mrb[0].mxu0 %v182
        %v551 = vpop.f32.mrb[0].mxu0
        %v552 = vadd.f32 %v367, %v551
        %v553 = vpop.f32.mrb[0].mxu0
        %554 = vmatprep.mubr.f32.mxu0 0.0
        %555 = vmatmul.mubr.f32.gmra.mrb[0].mxu0 %v185
        %v556 = vpop.f32.mrb[0].mxu0
        %v557 = vadd.f32 %v372, %v556
        %v558 = vpop.f32.mrb[0].mxu0
        %559 = vmatprep.mubr.f32.mxu0 0.0
        %560 = vmatmul.mubr.f32.gmra.mrb[0].mxu0 %v188
        %v561 = vpop.f32.mrb[0].mxu0
        %v562 = vadd.f32 %v377, %v561
        %v563 = vpop.f32.mrb[0].mxu0
        %564 = vmatprep.mubr.f32.mxu0 0.0
        %565 = vmatmul.mubr.f32.gmra.mrb[0].mxu0 %v191
        %v566 = vpop.f32.mrb[0].mxu0
        %v567 = vadd.f32 %v382, %v566
        %v568 = vpop.f32.mrb[0].mxu0
        %569 = vmatprep.mubr.f32.mxu0 0.0
        %570 = vmatmul.mubr.f32.gmra.mrb[0].mxu0 %v194
        %v571 = vpop.f32.mrb[0].mxu0
        %v572 = vadd.f32 %v387, %v571
        %v573 = vpop.f32.mrb[0].mxu0
        %574 = vmatprep.mubr.f32.mxu0 0.0
        %575 = vmatmul.mubr.f32.gmra.mrb[0].mxu0 %v197
        %v576 = vpop.f32.mrb[0].mxu0
        %v577 = vadd.f32 %v392, %v576
        %v578 = vpop.f32.mrb[0].mxu0
        %579 = vmatprep.mubr.f32.mxu0 0.0
        %580 = vmatmul.mubr.f32.gmra.mrb[0].mxu0 %v200
        %v581 = vpop.f32.mrb[0].mxu0
        %v582 = vadd.f32 %v397, %v581
        %v583 = vpop.f32.mrb[0].mxu0
        %584 = vmatprep.mubr.f32.mxu0 0.0
        %585 = vmatmul.mubr.f32.gmra.mrb[0].mxu0 %v203
        %v586 = vpop.f32.mrb[0].mxu0
        %v587 = vadd.f32 %v402, %v586
        %v588 = vpop.f32.mrb[0].mxu0
        %589 = vmatprep.mubr.f32.mxu0 0.0
        %590 = vmatmul.mubr.f32.gmra.mrb[0].mxu0 %v206
        %v591 = vpop.f32.mrb[0].mxu0
        %v592 = vadd.f32 %v407, %v591
        %v593 = vpop.f32.mrb[0].mxu0
        %594 = vmatprep.mubr.f32.mxu0 0.0
        %595 = vmatmul.mubr.f32.gmra.mrb[0].mxu0 %v209
        %v596 = vpop.f32.mrb[0].mxu0
        %v597 = vadd.f32 %v412, %v596
        %v598 = vpop.f32.mrb[0].mxu0
        %599 = vmatprep.mubr.f32.mxu0 0.0
        %600 = vmatmul.mubr.f32.gmra.mrb[0].mxu0 %v212
        %v601 = vpop.f32.mrb[0].mxu0
        %v602 = vadd.f32 %v417, %v601
        %v603 = vpop.f32.mrb[0].mxu0
        %604 = vmatprep.mubr.f32.mxu0 0.0
        %605 = vmatmul.mubr.f32.gmra.mrb[0].mxu0 %v215
        %v606 = vpop.f32.mrb[0].mxu0
        %v607 = vadd.f32 %v422, %v606
        %v608 = vpop.f32.mrb[0].mxu0
        %609 = vmatprep.mubr.f32.mxu0 0.0
        %610 = vmatmul.mubr.f32.gmra.mrb[0].mxu0 %v218
        %v611 = vpop.f32.mrb[0].mxu0
        %v612 = vadd.f32 %v427, %v611
        %v613 = vpop.f32.mrb[0].mxu0
        %614 = vmatprep.mubr.f32.mxu0 0.0
        %615 = vmatmul.mubr.f32.gmra.mrb[0].mxu0 %v221
        %v616 = vpop.f32.mrb[0].mxu0
        %v617 = vadd.f32 %v432, %v616
        %v618 = vpop.f32.mrb[0].mxu0
        %619 = vmatprep.mubr.f32.mxu0 0.0
        %620 = vmatmul.mubr.f32.gmra.mrb[0].mxu0 %v224
        %v621 = vpop.f32.mrb[0].mxu0
        %v622 = vadd.f32 %v437, %v621
        %v623 = vpop.f32.mrb[0].mxu0
        %624 = vmatprep.mubr.f32.mxu0 0.0
        %625 = vmatmul.mubr.f32.gmra.mrb[0].mxu0 %v227
        %v626 = vpop.f32.mrb[0].mxu0
        %v627 = vadd.f32 %v442, %v626
        %v628 = vpop.f32.mrb[0].mxu0
        %629 = vmatprep.mubr.f32.mxu0 0.0
        %630 = vmatmul.mubr.f32.gmra.mrb[0].mxu0 %v230
        %v631 = vpop.f32.mrb[0].mxu0
        %v632 = vadd.f32 %v447, %v631
        %v633 = vpop.f32.mrb[0].mxu0
        %634 = vmatprep.mubr.f32.mxu0 0.0
        %635 = vmatmul.mubr.f32.gmra.mrb[0].mxu0 %v233
        %v636 = vpop.f32.mrb[0].mxu0
        %v637 = vadd.f32 %v452, %v636
        %v638 = vpop.f32.mrb[0].mxu0
        %639 = vmatprep.mubr.f32.mxu0 0.0
        %640 = vmatmul.mubr.f32.gmra.mrb[0].mxu0 %v236
        %v641 = vpop.f32.mrb[0].mxu0
        %v642 = vadd.f32 %v457, %v641
        %v643 = vpop.f32.mrb[0].mxu0
        %644 = vmatprep.mubr.f32.mxu0 0.0
        %645 = vmatmul.mubr.f32.gmra.mrb[0].mxu0 %v239
        %v646 = vpop.f32.mrb[0].mxu0
        %v647 = vadd.f32 %v462, %v646
        %v648 = vpop.f32.mrb[0].mxu0
        %649 = vmatprep.mubr.f32.mxu0 0.0
        %650 = vmatmul.mubr.f32.gmra.mrb[0].mxu0 %v242
        %v651 = vpop.f32.mrb[0].mxu0
        %v652 = vadd.f32 %v467, %v651
        %v653 = vpop.f32.mrb[0].mxu0
        %654 = vmatprep.mubr.f32.mxu0 0.0
        %655 = vmatmul.mubr.f32.gmra.mrb[0].mxu0 %v245
        %v656 = vpop.f32.mrb[0].mxu0
        %v657 = vadd.f32 %v472, %v656
        %v658 = vpop.f32.mrb[0].mxu0
        %659 = vmatprep.mubr.f32.mxu0 0.0
        %660 = vmatmul.mubr.f32.gmra.mrb[0].mxu0 %v248
        %v661 = vpop.f32.mrb[0].mxu0
        %v662 = vadd.f32 %v477, %v661
        %v663 = vpop.f32.mrb[0].mxu0
        %664 = vmatprep.mubr.f32.mxu0 0.0
        %665 = vmatmul.mubr.f32.gmra.mrb[0].mxu0 %v251
        %v666 = vpop.f32.mrb[0].mxu0
        %v667 = vadd.f32 %v482, %v666
        %v668 = vpop.f32.mrb[0].mxu0
        %669 = vdwg.mxu0
        %v670 = vlaneseq
        %v671 = vshrl.u32 %v670, 7
        %v672 = vadd.s32 %v671, 8
        %v673 = vadd.s32 %v671, 16
        %v674 = vadd.s32 %v671, 24
        %v675 = vadd.s32 %v671, 32
        %v676 = vadd.s32 %v671, 40
        %v677 = vadd.s32 %v671, 48
        %v678 = vadd.s32 %v671, 56
        %v679 = vadd.s32 %v671, 64
        %v680 = vadd.s32 %v671, 72
        %v681 = vadd.s32 %v671, 80
        %v682 = vadd.s32 %v671, 88
        %v683 = vadd.s32 %v671, 96
        %v684 = vadd.s32 %v671, 104
        %v685 = vadd.s32 %v671, 112
        %v686 = vadd.s32 %v671, 120
        %v687 = vadd.s32 %v671, 128
        %v688 = vadd.s32 %v671, 136
        %v689 = vadd.s32 %v671, 144
        %v690 = vadd.s32 %v671, 152
        %v691 = vadd.s32 %v671, 160
        %v692 = vadd.s32 %v671, 168
        %v693 = vadd.s32 %v671, 176
        %v694 = vadd.s32 %v671, 184
        %v695 = vlaneseq
        %v696 = vand.u32 %v695, 127
        %v697 = vadd.s32 %v696, 128
        %v698 = vadd.s32 %v696, 256
        %s699 = smul.u32 %s20, 192
        %v700 = vstv %s699
        %v701 = vadd.s32 %v700, %v671
        %v702 = vadd.s32 %v700, %v672
        %v703 = vadd.s32 %v700, %v673
        %v704 = vadd.s32 %v700, %v674
        %v705 = vadd.s32 %v700, %v675
        %v706 = vadd.s32 %v700, %v676
        %v707 = vadd.s32 %v700, %v677
        %v708 = vadd.s32 %v700, %v678
        %v709 = vadd.s32 %v700, %v679
        %v710 = vadd.s32 %v700, %v680
        %v711 = vadd.s32 %v700, %v681
        %v712 = vadd.s32 %v700, %v682
        %v713 = vadd.s32 %v700, %v683
        %v714 = vadd.s32 %v700, %v684
        %v715 = vadd.s32 %v700, %v685
        %v716 = vadd.s32 %v700, %v686
        %v717 = vadd.s32 %v700, %v687
        %v718 = vadd.s32 %v700, %v688
        %v719 = vadd.s32 %v700, %v689
        %v720 = vadd.s32 %v700, %v690
        %v721 = vadd.s32 %v700, %v691
        %v722 = vadd.s32 %v700, %v692
        %v723 = vadd.s32 %v700, %v693
        %v724 = vadd.s32 %v700, %v694
        %vm725 = vcmp.eq.s32.totalorder %v696, %v701
        %vm726 = vcmp.eq.s32.totalorder %v697, %v701
        %vm727 = vcmp.eq.s32.totalorder %v698, %v701
        %vm728 = vcmp.eq.s32.totalorder %v696, %v702
        %vm729 = vcmp.eq.s32.totalorder %v697, %v702
        %vm730 = vcmp.eq.s32.totalorder %v698, %v702
        %vm731 = vcmp.eq.s32.totalorder %v696, %v703
        %vm732 = vcmp.eq.s32.totalorder %v697, %v703
        %vm733 = vcmp.eq.s32.totalorder %v698, %v703
        %vm734 = vcmp.eq.s32.totalorder %v696, %v704
        %vm735 = vcmp.eq.s32.totalorder %v697, %v704
        %vm736 = vcmp.eq.s32.totalorder %v698, %v704
        %vm737 = vcmp.eq.s32.totalorder %v696, %v705
        %vm738 = vcmp.eq.s32.totalorder %v697, %v705
        %vm739 = vcmp.eq.s32.totalorder %v698, %v705
        %vm740 = vcmp.eq.s32.totalorder %v696, %v706
        %vm741 = vcmp.eq.s32.totalorder %v697, %v706
        %vm742 = vcmp.eq.s32.totalorder %v698, %v706
        %vm743 = vcmp.eq.s32.totalorder %v696, %v707
        %vm744 = vcmp.eq.s32.totalorder %v697, %v707
        %vm745 = vcmp.eq.s32.totalorder %v698, %v707
        %vm746 = vcmp.eq.s32.totalorder %v696, %v708
        %vm747 = vcmp.eq.s32.totalorder %v697, %v708
        %vm748 = vcmp.eq.s32.totalorder %v698, %v708
        %vm749 = vcmp.eq.s32.totalorder %v696, %v709
        %vm750 = vcmp.eq.s32.totalorder %v697, %v709
        %vm751 = vcmp.eq.s32.totalorder %v698, %v709
        %vm752 = vcmp.eq.s32.totalorder %v696, %v710
        %vm753 = vcmp.eq.s32.totalorder %v697, %v710
        %vm754 = vcmp.eq.s32.totalorder %v698, %v710
        %vm755 = vcmp.eq.s32.totalorder %v696, %v711
        %vm756 = vcmp.eq.s32.totalorder %v697, %v711
        %vm757 = vcmp.eq.s32.totalorder %v698, %v711
        %vm758 = vcmp.eq.s32.totalorder %v696, %v712
        %vm759 = vcmp.eq.s32.totalorder %v697, %v712
        %vm760 = vcmp.eq.s32.totalorder %v698, %v712
        %vm761 = vcmp.eq.s32.totalorder %v696, %v713
        %vm762 = vcmp.eq.s32.totalorder %v697, %v713
        %vm763 = vcmp.eq.s32.totalorder %v698, %v713
        %vm764 = vcmp.eq.s32.totalorder %v696, %v714
        %vm765 = vcmp.eq.s32.totalorder %v697, %v714
        %vm766 = vcmp.eq.s32.totalorder %v698, %v714
        %vm767 = vcmp.eq.s32.totalorder %v696, %v715
        %vm768 = vcmp.eq.s32.totalorder %v697, %v715
        %vm769 = vcmp.eq.s32.totalorder %v698, %v715
        %vm770 = vcmp.eq.s32.totalorder %v696, %v716
        %vm771 = vcmp.eq.s32.totalorder %v697, %v716
        %vm772 = vcmp.eq.s32.totalorder %v698, %v716
        %vm773 = vcmp.eq.s32.totalorder %v696, %v717
        %vm774 = vcmp.eq.s32.totalorder %v697, %v717
        %vm775 = vcmp.eq.s32.totalorder %v698, %v717
        %vm776 = vcmp.eq.s32.totalorder %v696, %v718
        %vm777 = vcmp.eq.s32.totalorder %v697, %v718
        %vm778 = vcmp.eq.s32.totalorder %v698, %v718
        %vm779 = vcmp.eq.s32.totalorder %v696, %v719
        %vm780 = vcmp.eq.s32.totalorder %v697, %v719
        %vm781 = vcmp.eq.s32.totalorder %v698, %v719
        %vm782 = vcmp.eq.s32.totalorder %v696, %v720
        %vm783 = vcmp.eq.s32.totalorder %v697, %v720
        %vm784 = vcmp.eq.s32.totalorder %v698, %v720
        %vm785 = vcmp.eq.s32.totalorder %v696, %v721
        %vm786 = vcmp.eq.s32.totalorder %v697, %v721
        %vm787 = vcmp.eq.s32.totalorder %v698, %v721
        %vm788 = vcmp.eq.s32.totalorder %v696, %v722
        %vm789 = vcmp.eq.s32.totalorder %v697, %v722
        %vm790 = vcmp.eq.s32.totalorder %v698, %v722
        %vm791 = vcmp.eq.s32.totalorder %v696, %v723
        %vm792 = vcmp.eq.s32.totalorder %v697, %v723
        %vm793 = vcmp.eq.s32.totalorder %v698, %v723
        %vm794 = vcmp.eq.s32.totalorder %v696, %v724
        %vm795 = vcmp.eq.s32.totalorder %v697, %v724
        %vm796 = vcmp.eq.s32.totalorder %v698, %v724
        %v797 = vsel %vm725, %v180, 0.0
        %v798 = vsel %vm726, %v181, 0.0
        %v799 = vsel %vm727, %v182, 0.0
        %v800 = vsel %vm728, %v183, 0.0
        %v801 = vsel %vm729, %v184, 0.0
        %v802 = vsel %vm730, %v185, 0.0
        %v803 = vsel %vm731, %v186, 0.0
        %v804 = vsel %vm732, %v187, 0.0
        %v805 = vsel %vm733, %v188, 0.0
        %v806 = vsel %vm734, %v189, 0.0
        %v807 = vsel %vm735, %v190, 0.0
        %v808 = vsel %vm736, %v191, 0.0
        %v809 = vsel %vm737, %v192, 0.0
        %v810 = vsel %vm738, %v193, 0.0
        %v811 = vsel %vm739, %v194, 0.0
        %v812 = vsel %vm740, %v195, 0.0
        %v813 = vsel %vm741, %v196, 0.0
        %v814 = vsel %vm742, %v197, 0.0
        %v815 = vsel %vm743, %v198, 0.0
        %v816 = vsel %vm744, %v199, 0.0
        %v817 = vsel %vm745, %v200, 0.0
        %v818 = vsel %vm746, %v201, 0.0
        %v819 = vsel %vm747, %v202, 0.0
        %v820 = vsel %vm748, %v203, 0.0
        %v821 = vsel %vm749, %v204, 0.0
        %v822 = vsel %vm750, %v205, 0.0
        %v823 = vsel %vm751, %v206, 0.0
        %v824 = vsel %vm752, %v207, 0.0
        %v825 = vsel %vm753, %v208, 0.0
        %v826 = vsel %vm754, %v209, 0.0
        %v827 = vsel %vm755, %v210, 0.0
        %v828 = vsel %vm756, %v211, 0.0
        %v829 = vsel %vm757, %v212, 0.0
        %v830 = vsel %vm758, %v213, 0.0
        %v831 = vsel %vm759, %v214, 0.0
        %v832 = vsel %vm760, %v215, 0.0
        %v833 = vsel %vm761, %v216, 0.0
        %v834 = vsel %vm762, %v217, 0.0
        %v835 = vsel %vm763, %v218, 0.0
        %v836 = vsel %vm764, %v219, 0.0
        %v837 = vsel %vm765, %v220, 0.0
        %v838 = vsel %vm766, %v221, 0.0
        %v839 = vsel %vm767, %v222, 0.0
        %v840 = vsel %vm768, %v223, 0.0
        %v841 = vsel %vm769, %v224, 0.0
        %v842 = vsel %vm770, %v225, 0.0
        %v843 = vsel %vm771, %v226, 0.0
        %v844 = vsel %vm772, %v227, 0.0
        %v845 = vsel %vm773, %v228, 0.0
        %v846 = vsel %vm774, %v229, 0.0
        %v847 = vsel %vm775, %v230, 0.0
        %v848 = vsel %vm776, %v231, 0.0
        %v849 = vsel %vm777, %v232, 0.0
        %v850 = vsel %vm778, %v233, 0.0
        %v851 = vsel %vm779, %v234, 0.0
        %v852 = vsel %vm780, %v235, 0.0
        %v853 = vsel %vm781, %v236, 0.0
        %v854 = vsel %vm782, %v237, 0.0
        %v855 = vsel %vm783, %v238, 0.0
        %v856 = vsel %vm784, %v239, 0.0
        %v857 = vsel %vm785, %v240, 0.0
        %v858 = vsel %vm786, %v241, 0.0
        %v859 = vsel %vm787, %v242, 0.0
        %v860 = vsel %vm788, %v243, 0.0
        %v861 = vsel %vm789, %v244, 0.0
        %v862 = vsel %vm790, %v245, 0.0
        %v863 = vsel %vm791, %v246, 0.0
        %v864 = vsel %vm792, %v247, 0.0
        %v865 = vsel %vm793, %v248, 0.0
        %v866 = vsel %vm794, %v249, 0.0
        %v867 = vsel %vm795, %v250, 0.0
        %v868 = vsel %vm796, %v251, 0.0
        %v869 = vadd.f32 %v797, %v798
        %v870 = vadd.f32 %v869, %v799
        %871 = vadd.xlane.f32.xlu0 %v870
        %v872 = vpop.xlane.xlu0 %871
        %v873 = vadd.f32 %v800, %v801
        %v874 = vadd.f32 %v873, %v802
        %875 = vadd.xlane.f32.xlu0 %v874
        %v876 = vpop.xlane.xlu0 %875
        %v877 = vadd.f32 %v803, %v804
        %v878 = vadd.f32 %v877, %v805
        %879 = vadd.xlane.f32.xlu0 %v878
        %v880 = vpop.xlane.xlu0 %879
        %v881 = vadd.f32 %v806, %v807
        %v882 = vadd.f32 %v881, %v808
        %883 = vadd.xlane.f32.xlu0 %v882
        %v884 = vpop.xlane.xlu0 %883
        %v885 = vadd.f32 %v809, %v810
        %v886 = vadd.f32 %v885, %v811
        %887 = vadd.xlane.f32.xlu0 %v886
        %v888 = vpop.xlane.xlu0 %887
        %v889 = vadd.f32 %v812, %v813
        %v890 = vadd.f32 %v889, %v814
        %891 = vadd.xlane.f32.xlu0 %v890
        %v892 = vpop.xlane.xlu0 %891
        %v893 = vadd.f32 %v815, %v816
        %v894 = vadd.f32 %v893, %v817
        %895 = vadd.xlane.f32.xlu0 %v894
        %v896 = vpop.xlane.xlu0 %895
        %v897 = vadd.f32 %v818, %v819
        %v898 = vadd.f32 %v897, %v820
        %899 = vadd.xlane.f32.xlu0 %v898
        %v900 = vpop.xlane.xlu0 %899
        %v901 = vadd.f32 %v821, %v822
        %v902 = vadd.f32 %v901, %v823
        %903 = vadd.xlane.f32.xlu0 %v902
        %v904 = vpop.xlane.xlu0 %903
        %v905 = vadd.f32 %v824, %v825
        %v906 = vadd.f32 %v905, %v826
        %907 = vadd.xlane.f32.xlu0 %v906
        %v908 = vpop.xlane.xlu0 %907
        %v909 = vadd.f32 %v827, %v828
        %v910 = vadd.f32 %v909, %v829
        %911 = vadd.xlane.f32.xlu0 %v910
        %v912 = vpop.xlane.xlu0 %911
        %v913 = vadd.f32 %v830, %v831
        %v914 = vadd.f32 %v913, %v832
        %915 = vadd.xlane.f32.xlu0 %v914
        %v916 = vpop.xlane.xlu0 %915
        %v917 = vadd.f32 %v833, %v834
        %v918 = vadd.f32 %v917, %v835
        %919 = vadd.xlane.f32.xlu0 %v918
        %v920 = vpop.xlane.xlu0 %919
        %v921 = vadd.f32 %v836, %v837
        %v922 = vadd.f32 %v921, %v838
        %923 = vadd.xlane.f32.xlu0 %v922
        %v924 = vpop.xlane.xlu0 %923
        %v925 = vadd.f32 %v839, %v840
        %v926 = vadd.f32 %v925, %v841
        %927 = vadd.xlane.f32.xlu0 %v926
        %v928 = vpop.xlane.xlu0 %927
        %v929 = vadd.f32 %v842, %v843
        %v930 = vadd.f32 %v929, %v844
        %931 = vadd.xlane.f32.xlu0 %v930
        %v932 = vpop.xlane.xlu0 %931
        %v933 = vadd.f32 %v845, %v846
        %v934 = vadd.f32 %v933, %v847
        %935 = vadd.xlane.f32.xlu0 %v934
        %v936 = vpop.xlane.xlu0 %935
        %v937 = vadd.f32 %v848, %v849
        %v938 = vadd.f32 %v937, %v850
        %939 = vadd.xlane.f32.xlu0 %v938
        %v940 = vpop.xlane.xlu0 %939
        %v941 = vadd.f32 %v851, %v852
        %v942 = vadd.f32 %v941, %v853
        %943 = vadd.xlane.f32.xlu0 %v942
        %v944 = vpop.xlane.xlu0 %943
        %v945 = vadd.f32 %v854, %v855
        %v946 = vadd.f32 %v945, %v856
        %947 = vadd.xlane.f32.xlu0 %v946
        %v948 = vpop.xlane.xlu0 %947
        %v949 = vadd.f32 %v857, %v858
        %v950 = vadd.f32 %v949, %v859
        %951 = vadd.xlane.f32.xlu0 %v950
        %v952 = vpop.xlane.xlu0 %951
        %v953 = vadd.f32 %v860, %v861
        %v954 = vadd.f32 %v953, %v862
        %955 = vadd.xlane.f32.xlu0 %v954
        %v956 = vpop.xlane.xlu0 %955
        %v957 = vadd.f32 %v863, %v864
        %v958 = vadd.f32 %v957, %v865
        %959 = vadd.xlane.f32.xlu0 %v958
        %v960 = vpop.xlane.xlu0 %959
        %v961 = vadd.f32 %v866, %v867
        %v962 = vadd.f32 %v961, %v868
        %963 = vadd.xlane.f32.xlu0 %v962
        %v964 = vpop.xlane.xlu0 %963
        %s965 = scalar_lea.vmem [#allocation5], %s699
        %v966 = vld [vmem:[%s965] sm:$0xff]
        %v967 = vld [vmem:[%s965 + $0x8] sm:$0xff]
        %v968 = vld [vmem:[%s965 + $0x10] sm:$0xff]
        %v969 = vld [vmem:[%s965 + $0x18] sm:$0xff]
        %v970 = vld [vmem:[%s965 + $0x20] sm:$0xff]
        %v971 = vld [vmem:[%s965 + $0x28] sm:$0xff]
        %v972 = vld [vmem:[%s965 + $0x30] sm:$0xff]
        %v973 = vld [vmem:[%s965 + $0x38] sm:$0xff]
        %v974 = vld [vmem:[%s965 + $0x40] sm:$0xff]
        %v975 = vld [vmem:[%s965 + $0x48] sm:$0xff]
        %v976 = vld [vmem:[%s965 + $0x50] sm:$0xff]
        %v977 = vld [vmem:[%s965 + $0x58] sm:$0xff]
        %v978 = vld [vmem:[%s965 + $0x60] sm:$0xff]
        %v979 = vld [vmem:[%s965 + $0x68] sm:$0xff]
        %v980 = vld [vmem:[%s965 + $0x70] sm:$0xff]
        %v981 = vld [vmem:[%s965 + $0x78] sm:$0xff]
        %v982 = vld [vmem:[%s965 + $0x80] sm:$0xff]
        %v983 = vld [vmem:[%s965 + $0x88] sm:$0xff]
        %v984 = vld [vmem:[%s965 + $0x90] sm:$0xff]
        %v985 = vld [vmem:[%s965 + $0x98] sm:$0xff]
        %v986 = vld [vmem:[%s965 + $0xa0] sm:$0xff]
        %v987 = vld [vmem:[%s965 + $0xa8] sm:$0xff]
        %v988 = vld [vmem:[%s965 + $0xb0] sm:$0xff]
        %v989 = vld [vmem:[%s965 + $0xb8] sm:$0xff]
        %v990 = vmul.f32 %v872, %v966
        %v991 = vmul.f32 %v876, %v967
        %v992 = vmul.f32 %v880, %v968
        %v993 = vmul.f32 %v884, %v969
        %v994 = vmul.f32 %v888, %v970
        %v995 = vmul.f32 %v892, %v971
        %v996 = vmul.f32 %v896, %v972
        %v997 = vmul.f32 %v900, %v973
        %v998 = vmul.f32 %v904, %v974
        %v999 = vmul.f32 %v908, %v975
        %v1000 = vmul.f32 %v912, %v976
        %v1001 = vmul.f32 %v916, %v977
        %v1002 = vmul.f32 %v920, %v978
        %v1003 = vmul.f32 %v924, %v979
        %v1004 = vmul.f32 %v928, %v980
        %v1005 = vmul.f32 %v932, %v981
        %v1006 = vmul.f32 %v936, %v982
        %v1007 = vmul.f32 %v940, %v983
        %v1008 = vmul.f32 %v944, %v984
        %v1009 = vmul.f32 %v948, %v985
        %v1010 = vmul.f32 %v952, %v986
        %v1011 = vmul.f32 %v956, %v987
        %v1012 = vmul.f32 %v960, %v988
        %v1013 = vmul.f32 %v964, %v989
        %v1014 = vsub.f32 %v552, %v990
        %v1015 = vsub.f32 %v557, %v991
        %v1016 = vsub.f32 %v562, %v992
        %v1017 = vsub.f32 %v567, %v993
        %v1018 = vsub.f32 %v572, %v994
        %v1019 = vsub.f32 %v577, %v995
        %v1020 = vsub.f32 %v582, %v996
        %v1021 = vsub.f32 %v587, %v997
        %v1022 = vsub.f32 %v592, %v998
        %v1023 = vsub.f32 %v597, %v999
        %v1024 = vsub.f32 %v602, %v1000
        %v1025 = vsub.f32 %v607, %v1001
        %v1026 = vsub.f32 %v612, %v1002
        %v1027 = vsub.f32 %v617, %v1003
        %v1028 = vsub.f32 %v622, %v1004
        %v1029 = vsub.f32 %v627, %v1005
        %v1030 = vsub.f32 %v632, %v1006
        %v1031 = vsub.f32 %v637, %v1007
        %v1032 = vsub.f32 %v642, %v1008
        %v1033 = vsub.f32 %v647, %v1009
        %v1034 = vsub.f32 %v652, %v1010
        %v1035 = vsub.f32 %v657, %v1011
        %v1036 = vsub.f32 %v662, %v1012
        %v1037 = vsub.f32 %v667, %v1013
        %1038 = vst [vmem:[%s177] sm:$0xff] %v1014
        %1039 = vst [vmem:[%s177 + $0x8] sm:$0xff] %v1015
        %1040 = vst [vmem:[%s177 + $0x10] sm:$0xff] %v1016
        %1041 = vst [vmem:[%s177 + $0x18] sm:$0xff] %v1017
        %1042 = vst [vmem:[%s177 + $0x20] sm:$0xff] %v1018
        %1043 = vst [vmem:[%s177 + $0x28] sm:$0xff] %v1019
        %1044 = vst [vmem:[%s177 + $0x30] sm:$0xff] %v1020
        %1045 = vst [vmem:[%s177 + $0x38] sm:$0xff] %v1021
        %1046 = vst [vmem:[%s177 + $0x40] sm:$0xff] %v1022
        %1047 = vst [vmem:[%s177 + $0x48] sm:$0xff] %v1023
        %1048 = vst [vmem:[%s177 + $0x50] sm:$0xff] %v1024
        %1049 = vst [vmem:[%s177 + $0x58] sm:$0xff] %v1025
        %1050 = vst [vmem:[%s177 + $0x60] sm:$0xff] %v1026
        %1051 = vst [vmem:[%s177 + $0x68] sm:$0xff] %v1027
        %1052 = vst [vmem:[%s177 + $0x70] sm:$0xff] %v1028
        %1053 = vst [vmem:[%s177 + $0x78] sm:$0xff] %v1029
        %1054 = vst [vmem:[%s177 + $0x80] sm:$0xff] %v1030
        %1055 = vst [vmem:[%s177 + $0x88] sm:$0xff] %v1031
        %1056 = vst [vmem:[%s177 + $0x90] sm:$0xff] %v1032
        %1057 = vst [vmem:[%s177 + $0x98] sm:$0xff] %v1033
        %1058 = vst [vmem:[%s177 + $0xa0] sm:$0xff] %v1034
        %1059 = vst [vmem:[%s177 + $0xa8] sm:$0xff] %v1035
        %1060 = vst [vmem:[%s177 + $0xb0] sm:$0xff] %v1036
        %1061 = vst [vmem:[%s177 + $0xb8] sm:$0xff] %v1037
        %s1062 = sand.u32 %s75, 1
        %s1063 = scalar_lea.sflag [#allocation4], %s1062
        %s1064 = sand.u32 %s75, 1
        %s1065 = smul.addr %s1064, 192
        %s1066 = scalar_lea.vmem [#allocation7], %s1065
        // Predicated region
        $region37: #{self_expression.1} parent=27 // pred_check
          %p1067 = pneg %p85
        $region38: #{self_expression.1} parent=27 // pred_check_branch
          %1069 = sbr.rel (%p1067) target = $region40
        $region39: #{self_expression.1} parent=27 // pred_region
          %s1070 = smul.u32 24, %s20
          %s1072 = ssub.s32 3072, 3072
          %1073 = vsyncadd %s1063, %s1072
          %s1074 = smul.addr %s1070, 128
          %s1075 = scalar_lea.hbm %s2, %s1074
          %s1076 = sshll.u32 %s1066, 4
          %s1077 = int_to_ptr.vmem [resolvable:$true] %s1076
          %1082 = dma.vmem_to_hbm [thread:$0]  %s1077, 3072, %s1075, %s1063, 128, 128, 8
        $region40: #{self_expression.1} parent=27 // pred_fallthru
          _
      $region28: #{self_expression.1} parent=5 // pred_fallthru
        _
      %p1083 = scmp.le.s32.totalorder 2, %s15
      // Predicated region
      $region41: #{self_expression.1} parent=5 // pred_check
        %p1084 = pneg %p1083
      $region42: #{self_expression.1} parent=5 // pred_check_branch
        %1086 = sbr.rel (%p1084) target = $region44
      $region43: #{self_expression.1} parent=5 // pred_region
        %s1087 = ssub.s32 %s15, 2
        // Predicated region
        $region45: #{self_expression.1} parent=43 // pred_check
          %p1088 = pneg %p91
        $region46: #{self_expression.1} parent=43 // pred_check_branch
          %1090 = sbr.rel (%p1088) target = $region48
        $region47: #{self_expression.1} parent=43 // pred_region
          %s1091 = sand.u32 %s76, 1
          %s1092 = scalar_lea.sflag [#allocation4], %s1091
          %s1093 = sand.u32 %s76, 1
          %s1094 = smul.addr %s1093, 192
          %s1095 = scalar_lea.vmem [#allocation7], %s1094
          %1096 = dma.done %s1092, 3072
        $region48: #{self_expression.1} parent=43 // pred_fallthru
          _
      $region44: #{self_expression.1} parent=5 // pred_fallthru
        _
    $region6: #{self_expression.1} parent=1 // loop_footer
      %s19 = sadd.s32 1, %s15
    $region7: #{self_expression.1} parent=1 // loop_footer_branch
      %14 = sbr.rel target = $region3
    $region8: #{self_expression.1} parent=1 // loop_exit
      _
    %1097 = vsyncpa [#allocation3], 1
    %s1098 = scalar_lea.sflag [#allocation3], 1
    %1099 = vsyncpa %s1098, 1
    %1100 = vsyncpa [#allocation6], 1
    %1101 = vsyncpa [#allocation4], 1
    %s1102 = scalar_lea.sflag [#allocation4], 1
    %1103 = vsyncpa %s1102, 1

</llo_original>
